<compile_context>
chip_gen: v7x
topology: tpu7x:2x2x1
jax: 0.10.0
libtpu: 0.0.40
codegen_flags: <defaults>
</compile_context>

<pallas_src>
import functools

import jax
import jax.numpy as jnp
from jax.experimental import pallas as pl
from jax.experimental.pallas import tpu as pltpu

EPS = 1e-5


def _bn_relu_fused(h, gamma, beta):
    """Training-mode BatchNorm over the point axis (axis=1) fused with ReLU.

    h: (C, P); gamma/beta: (C, 1). One-pass stats (E[x^2] - E[x]^2), then a single
    scale/shift FMA pass over h.
    """
    inv_n = 1.0 / h.shape[1]
    mean = jnp.sum(h, axis=1, keepdims=True) * inv_n
    msq = jnp.sum(h * h, axis=1, keepdims=True) * inv_n
    var = jnp.maximum(msq - mean * mean, 0.0)          # guard tiny negative cancellation
    scale = gamma * jax.lax.rsqrt(var + EPS)           # rsqrt -> EUP slot (free-ish)
    shift = beta - mean * scale
    return jnp.maximum(h * scale + shift, 0.0)


def _slave_kernel(num_layers, cin,
                  x_ref, latent_ref,
                  w1_ref, g1_ref, be1_ref,
                  w2_ref, g2_ref, be2_ref,
                  wl_ref, gl_ref, bel_ref,
                  wlast_ref, blast_ref,
                  o_ref):
    # conv1 (K = cin, tiny) as broadcast FMAs + latent.  Conv1 bias feeds bn1 -> dropped.
    x = x_ref[...]                                     # (cin, P)
    w1 = w1_ref[...]                                   # (bottleneck, cin)
    h = latent_ref[...]                                # (bottleneck, P)
    for c in range(cin):                               # static, cin is small (2)
        h = h + w1[:, c:c + 1] * x[c:c + 1, :]
    h = _bn_relu_fused(h, g1_ref[...], be1_ref[...])

    # conv2 (bias dropped: feeds bn2), bn2, relu
    h = jnp.dot(w2_ref[...], h, preferred_element_type=jnp.float32)
    h = _bn_relu_fused(h, g2_ref[...], be2_ref[...])

    # hidden stack (static unroll; num_layers is tiny).  Biases dropped (feed BN).
    for i in range(num_layers):
        h = jnp.dot(wl_ref[i], h, preferred_element_type=jnp.float32)
        h = _bn_relu_fused(h, gl_ref[i], bel_ref[i])

    # last conv -> 3 output channels (bias kept, no BN), tanh.  Output is (3, P):
    # lane-dense last dim -> unmasked stores.
    out = jnp.tanh(jnp.dot(wlast_ref[...], h, preferred_element_type=jnp.float32)
                   + blast_ref[...])
    o_ref[...] = out.astype(o_ref.dtype)


def proto_2d_to_3d_slave(x, latent, params, num_layers):
    """x: (B, dim_template, N), latent: (B, bottleneck, N) -> (B, 3, N) (PyTorch NCL)."""
    B, cin, N = x.shape
    P = B * N
    # Channel-major: (B, C, N) -> (C, B, N) -> (C, B*N).  Leading-dim transpose only
    # (minor dim N preserved), so this is cheap layout plumbing, not an HBM shuffle.
    xc = jnp.transpose(x, (1, 0, 2)).reshape(cin, P)
    lc = jnp.transpose(latent, (1, 0, 2)).reshape(-1, P)

    ins = (xc, lc,
           params["w1"], params["g1"], params["be1"],
           params["w2"], params["g2"], params["be2"],
           params["wl"], params["gl"], params["bel"],
           params["wlast"], params["blast"])

    out = pl.pallas_call(
        functools.partial(_slave_kernel, num_layers, cin),
        out_shape=jax.ShapeDtypeStruct((3, P), jnp.float32),
        in_specs=[pl.BlockSpec(memory_space=pltpu.MemorySpace.VMEM)] * len(ins),
        out_specs=pl.BlockSpec(memory_space=pltpu.MemorySpace.VMEM),
    )(*ins)

    return jnp.transpose(out.reshape(3, B, N), (1, 0, 2))    # back to (B, 3, N)


def _init_params(key, dim_template, bottleneck, hidden, num_layers):
    """Deterministic synthetic params.  Weights stored (C_out, C_in) (channel-major
    kernel does W @ h); biases / gamma / beta are (C, 1) columns."""
    ks = jax.random.split(key, 4 + num_layers)

    def conv(k, cin, cout):
        scale = 1.0 / jnp.sqrt(cin)
        w = jax.random.uniform(k, (cout, cin), jnp.float32, -scale, scale)
        b = jax.random.uniform(jax.random.fold_in(k, 1), (cout, 1), jnp.float32,
                               -scale, scale)
        return w, b

    p = {}
    p["w1"], p["b1"] = conv(ks[0], dim_template, bottleneck)
    p["w2"], p["b2"] = conv(ks[1], bottleneck, hidden)
    wl, bl = [], []
    for i in range(num_layers):
        w, b = conv(ks[2 + i], hidden, hidden)
        wl.append(w); bl.append(b)
    p["wl"] = jnp.stack(wl)                      # (L, H, H)
    p["bl"] = jnp.stack(bl)                      # (L, H, 1)  (reference only)
    p["wlast"], p["blast"] = conv(ks[2 + num_layers], hidden, 3)
    # BatchNorm affine params at PyTorch init: gamma=1, beta=0
    p["g1"] = jnp.ones((bottleneck, 1), jnp.float32)
    p["be1"] = jnp.zeros((bottleneck, 1), jnp.float32)
    p["g2"] = jnp.ones((hidden, 1), jnp.float32)
    p["be2"] = jnp.zeros((hidden, 1), jnp.float32)
    p["gl"] = jnp.ones((num_layers, hidden, 1), jnp.float32)
    p["bel"] = jnp.zeros((num_layers, hidden, 1), jnp.float32)
    return p


def _bn_ref(h, gamma, beta):
    # Faithful PyTorch training-mode BN: two-pass, biased variance, eps=1e-5.
    mean = jnp.mean(h, axis=1, keepdims=True)
    var = jnp.mean((h - mean) ** 2, axis=1, keepdims=True)
    return (h - mean) * jax.lax.rsqrt(var + EPS) * gamma + beta


def _reference(x, latent, params, num_layers):
    """Plain-JAX reference of the original module math (biases included, two-pass BN)."""
    B, cin, N = x.shape
    P = B * N
    h = jnp.transpose(x, (1, 0, 2)).reshape(cin, P)
    lc = jnp.transpose(latent, (1, 0, 2)).reshape(-1, P)
    h = params["w1"] @ h + params["b1"] + lc
    h = jnp.maximum(_bn_ref(h, params["g1"], params["be1"]), 0.0)
    h = params["w2"] @ h + params["b2"]
    h = jnp.maximum(_bn_ref(h, params["g2"], params["be2"]), 0.0)
    for i in range(num_layers):
        h = params["wl"][i] @ h + params["bl"][i]
        h = jnp.maximum(_bn_ref(h, params["gl"][i], params["bel"][i]), 0.0)
    out = jnp.tanh(params["wlast"] @ h + params["blast"])
    return jnp.transpose(out.reshape(3, B, N), (1, 0, 2))


if __name__ == "__main__":
    # opt: dim_template=2, bottleneck_size=32, hidden_neurons=32, num_layers=2, activation='relu'
    B, DIM_TEMPLATE, N = 2, 2, 64
    BOTTLENECK, HIDDEN, NUM_LAYERS = 32, 32, 2

    key = jax.random.PRNGKey(0)
    kx, kl, kp = jax.random.split(key, 3)
    x = jax.random.normal(kx, (B, DIM_TEMPLATE, N), jnp.float32)       # 2D template points
    latent = jax.random.normal(kl, (B, BOTTLENECK, N), jnp.float32)    # per-point latent
    params = _init_params(kp, DIM_TEMPLATE, BOTTLENECK, HIDDEN, NUM_LAYERS)

    out = proto_2d_to_3d_slave(x, latent, params, NUM_LAYERS)
    out = jax.block_until_ready(out)
    assert out.shape == (B, 3, N), out.shape

    ref = jax.block_until_ready(_reference(x, latent, params, NUM_LAYERS))
    assert jnp.allclose(out, ref, atol=1e-4, rtol=1e-4), float(jnp.max(jnp.abs(out - ref)))

    print("KERNEL_OK")
</pallas_src>

<mosaic_0001>
module attributes {stable_mosaic.version = 11 : i64} {
  func.func @_slave_kernel(%arg0: memref<2x128xf32, #tpu.memory_space<vmem>>, %arg1: memref<32x128xf32, #tpu.memory_space<vmem>>, %arg2: memref<32x2xf32, #tpu.memory_space<vmem>>, %arg3: memref<32x1xf32, #tpu.memory_space<vmem>>, %arg4: memref<32x1xf32, #tpu.memory_space<vmem>>, %arg5: memref<32x32xf32, #tpu.memory_space<vmem>>, %arg6: memref<32x1xf32, #tpu.memory_space<vmem>>, %arg7: memref<32x1xf32, #tpu.memory_space<vmem>>, %arg8: memref<2x32x32xf32, #tpu.memory_space<vmem>>, %arg9: memref<2x32x1xf32, #tpu.memory_space<vmem>>, %arg10: memref<2x32x1xf32, #tpu.memory_space<vmem>>, %arg11: memref<3x32xf32, #tpu.memory_space<vmem>>, %arg12: memref<3x1xf32, #tpu.memory_space<vmem>>, %arg13: memref<3x128xf32, #tpu.memory_space<vmem>>) attributes {dimension_semantics = [], scalar_prefetch = 0 : i64, scratch_operands = 0 : i64, tpu.core_type = #tpu.core_type<tc>} {
    %c0 = arith.constant 0 : index
    %c0_0 = arith.constant 0 : index
    %0 = vector.load %arg0[%c0, %c0_0] : memref<2x128xf32, #tpu.memory_space<vmem>>, vector<2x128xf32>
    %c0_1 = arith.constant 0 : index
    %c0_2 = arith.constant 0 : index
    %1 = vector.load %arg2[%c0_1, %c0_2] : memref<32x2xf32, #tpu.memory_space<vmem>>, vector<32x2xf32>
    %c0_3 = arith.constant 0 : index
    %c0_4 = arith.constant 0 : index
    %2 = vector.load %arg1[%c0_3, %c0_4] : memref<32x128xf32, #tpu.memory_space<vmem>>, vector<32x128xf32>
    %3 = vector.extract_strided_slice %1 {offsets = [0, 0], sizes = [32, 1], strides = [1, 1]} : vector<32x2xf32> to vector<32x1xf32>
    %4 = vector.extract_strided_slice %0 {offsets = [0, 0], sizes = [1, 128], strides = [1, 1]} : vector<2x128xf32> to vector<1x128xf32>
    %5 = vector.broadcast %3 : vector<32x1xf32> to vector<32x128xf32>
    %6 = vector.broadcast %4 : vector<1x128xf32> to vector<32x128xf32>
    %7 = arith.mulf %5, %6 : vector<32x128xf32>
    %8 = arith.addf %2, %7 : vector<32x128xf32>
    %9 = vector.extract_strided_slice %1 {offsets = [0, 1], sizes = [32, 1], strides = [1, 1]} : vector<32x2xf32> to vector<32x1xf32>
    %10 = vector.extract_strided_slice %0 {offsets = [1, 0], sizes = [1, 128], strides = [1, 1]} : vector<2x128xf32> to vector<1x128xf32>
    %11 = vector.broadcast %9 : vector<32x1xf32> to vector<32x128xf32>
    %12 = vector.broadcast %10 : vector<1x128xf32> to vector<32x128xf32>
    %13 = arith.mulf %11, %12 : vector<32x128xf32>
    %14 = arith.addf %8, %13 : vector<32x128xf32>
    %c0_5 = arith.constant 0 : index
    %c0_6 = arith.constant 0 : index
    %15 = vector.load %arg3[%c0_5, %c0_6] : memref<32x1xf32, #tpu.memory_space<vmem>>, vector<32x1xf32>
    %c0_7 = arith.constant 0 : index
    %c0_8 = arith.constant 0 : index
    %16 = vector.load %arg4[%c0_7, %c0_8] : memref<32x1xf32, #tpu.memory_space<vmem>>, vector<32x1xf32>
    %cst = arith.constant dense<0.000000e+00> : vector<32xf32>
    %17 = vector.multi_reduction <add>, %14, %cst [1] : vector<32x128xf32> to vector<32xf32>
    %18 = vector.shape_cast %17 : vector<32xf32> to vector<32x1xf32>
    %cst_9 = arith.constant 7.812500e-03 : f32
    %19 = vector.broadcast %cst_9 : f32 to vector<32x1xf32>
    %20 = arith.mulf %18, %19 : vector<32x1xf32>
    %21 = arith.mulf %14, %14 : vector<32x128xf32>
    %cst_10 = arith.constant dense<0.000000e+00> : vector<32xf32>
    %22 = vector.multi_reduction <add>, %21, %cst_10 [1] : vector<32x128xf32> to vector<32xf32>
    %23 = vector.shape_cast %22 : vector<32xf32> to vector<32x1xf32>
    %cst_11 = arith.constant 7.812500e-03 : f32
    %24 = vector.broadcast %cst_11 : f32 to vector<32x1xf32>
    %25 = arith.mulf %23, %24 : vector<32x1xf32>
    %26 = arith.mulf %20, %20 : vector<32x1xf32>
    %27 = arith.subf %25, %26 : vector<32x1xf32>
    %cst_12 = arith.constant 0.000000e+00 : f32
    %28 = vector.broadcast %cst_12 : f32 to vector<32x1xf32>
    %29 = arith.maximumf %27, %28 : vector<32x1xf32>
    %cst_13 = arith.constant 9.99999974E-6 : f32
    %30 = vector.broadcast %cst_13 : f32 to vector<32x1xf32>
    %31 = arith.addf %29, %30 : vector<32x1xf32>
    %32 = math.rsqrt %31 : vector<32x1xf32>
    %33 = arith.mulf %15, %32 : vector<32x1xf32>
    %34 = arith.mulf %20, %33 : vector<32x1xf32>
    %35 = arith.subf %16, %34 : vector<32x1xf32>
    %36 = vector.broadcast %33 : vector<32x1xf32> to vector<32x128xf32>
    %37 = arith.mulf %14, %36 : vector<32x128xf32>
    %38 = vector.broadcast %35 : vector<32x1xf32> to vector<32x128xf32>
    %39 = arith.addf %37, %38 : vector<32x128xf32>
    %cst_14 = arith.constant 0.000000e+00 : f32
    %40 = vector.broadcast %cst_14 : f32 to vector<32x128xf32>
    %41 = arith.maximumf %39, %40 : vector<32x128xf32>
    %c0_15 = arith.constant 0 : index
    %c0_16 = arith.constant 0 : index
    %42 = vector.load %arg5[%c0_15, %c0_16] : memref<32x32xf32, #tpu.memory_space<vmem>>, vector<32x32xf32>
    %cst_17 = arith.constant dense<0.000000e+00> : vector<32x128xf32>
    %43 = tpu.matmul %42, %41, %cst_17 {dimension_numbers = #tpu.dot_dimension_numbers<[1], [0], [0], [1], [0, 0, 1, 1], [], []>} : vector<32x32xf32>, vector<32x128xf32>, vector<32x128xf32> -> vector<32x128xf32>
    %c0_18 = arith.constant 0 : index
    %c0_19 = arith.constant 0 : index
    %44 = vector.load %arg6[%c0_18, %c0_19] : memref<32x1xf32, #tpu.memory_space<vmem>>, vector<32x1xf32>
    %c0_20 = arith.constant 0 : index
    %c0_21 = arith.constant 0 : index
    %45 = vector.load %arg7[%c0_20, %c0_21] : memref<32x1xf32, #tpu.memory_space<vmem>>, vector<32x1xf32>
    %cst_22 = arith.constant dense<0.000000e+00> : vector<32xf32>
    %46 = vector.multi_reduction <add>, %43, %cst_22 [1] : vector<32x128xf32> to vector<32xf32>
    %47 = vector.shape_cast %46 : vector<32xf32> to vector<32x1xf32>
    %cst_23 = arith.constant 7.812500e-03 : f32
    %48 = vector.broadcast %cst_23 : f32 to vector<32x1xf32>
    %49 = arith.mulf %47, %48 : vector<32x1xf32>
    %50 = arith.mulf %43, %43 : vector<32x128xf32>
    %cst_24 = arith.constant dense<0.000000e+00> : vector<32xf32>
    %51 = vector.multi_reduction <add>, %50, %cst_24 [1] : vector<32x128xf32> to vector<32xf32>
    %52 = vector.shape_cast %51 : vector<32xf32> to vector<32x1xf32>
    %cst_25 = arith.constant 7.812500e-03 : f32
    %53 = vector.broadcast %cst_25 : f32 to vector<32x1xf32>
    %54 = arith.mulf %52, %53 : vector<32x1xf32>
    %55 = arith.mulf %49, %49 : vector<32x1xf32>
    %56 = arith.subf %54, %55 : vector<32x1xf32>
    %cst_26 = arith.constant 0.000000e+00 : f32
    %57 = vector.broadcast %cst_26 : f32 to vector<32x1xf32>
    %58 = arith.maximumf %56, %57 : vector<32x1xf32>
    %cst_27 = arith.constant 9.99999974E-6 : f32
    %59 = vector.broadcast %cst_27 : f32 to vector<32x1xf32>
    %60 = arith.addf %58, %59 : vector<32x1xf32>
    %61 = math.rsqrt %60 : vector<32x1xf32>
    %62 = arith.mulf %44, %61 : vector<32x1xf32>
    %63 = arith.mulf %49, %62 : vector<32x1xf32>
    %64 = arith.subf %45, %63 : vector<32x1xf32>
    %65 = vector.broadcast %62 : vector<32x1xf32> to vector<32x128xf32>
    %66 = arith.mulf %43, %65 : vector<32x128xf32>
    %67 = vector.broadcast %64 : vector<32x1xf32> to vector<32x128xf32>
    %68 = arith.addf %66, %67 : vector<32x128xf32>
    %cst_28 = arith.constant 0.000000e+00 : f32
    %69 = vector.broadcast %cst_28 : f32 to vector<32x128xf32>
    %70 = arith.maximumf %68, %69 : vector<32x128xf32>
    %c0_29 = arith.constant 0 : index
    %c0_30 = arith.constant 0 : index
    %c0_31 = arith.constant 0 : index
    %71 = vector.load %arg8[%c0_29, %c0_30, %c0_31] : memref<2x32x32xf32, #tpu.memory_space<vmem>>, vector<1x32x32xf32>
    %72 = vector.shape_cast %71 : vector<1x32x32xf32> to vector<32x32xf32>
    %cst_32 = arith.constant dense<0.000000e+00> : vector<32x128xf32>
    %73 = tpu.matmul %72, %70, %cst_32 {dimension_numbers = #tpu.dot_dimension_numbers<[1], [0], [0], [1], [0, 0, 1, 1], [], []>} : vector<32x32xf32>, vector<32x128xf32>, vector<32x128xf32> -> vector<32x128xf32>
    %c0_33 = arith.constant 0 : index
    %c0_34 = arith.constant 0 : index
    %c0_35 = arith.constant 0 : index
    %74 = vector.load %arg9[%c0_33, %c0_34, %c0_35] : memref<2x32x1xf32, #tpu.memory_space<vmem>>, vector<1x32x1xf32>
    %75 = vector.shape_cast %74 : vector<1x32x1xf32> to vector<32x1xf32>
    %c0_36 = arith.constant 0 : index
    %c0_37 = arith.constant 0 : index
    %c0_38 = arith.constant 0 : index
    %76 = vector.load %arg10[%c0_36, %c0_37, %c0_38] : memref<2x32x1xf32, #tpu.memory_space<vmem>>, vector<1x32x1xf32>
    %77 = vector.shape_cast %76 : vector<1x32x1xf32> to vector<32x1xf32>
    %cst_39 = arith.constant dense<0.000000e+00> : vector<32xf32>
    %78 = vector.multi_reduction <add>, %73, %cst_39 [1] : vector<32x128xf32> to vector<32xf32>
    %79 = vector.shape_cast %78 : vector<32xf32> to vector<32x1xf32>
    %cst_40 = arith.constant 7.812500e-03 : f32
    %80 = vector.broadcast %cst_40 : f32 to vector<32x1xf32>
    %81 = arith.mulf %79, %80 : vector<32x1xf32>
    %82 = arith.mulf %73, %73 : vector<32x128xf32>
    %cst_41 = arith.constant dense<0.000000e+00> : vector<32xf32>
    %83 = vector.multi_reduction <add>, %82, %cst_41 [1] : vector<32x128xf32> to vector<32xf32>
    %84 = vector.shape_cast %83 : vector<32xf32> to vector<32x1xf32>
    %cst_42 = arith.constant 7.812500e-03 : f32
    %85 = vector.broadcast %cst_42 : f32 to vector<32x1xf32>
    %86 = arith.mulf %84, %85 : vector<32x1xf32>
    %87 = arith.mulf %81, %81 : vector<32x1xf32>
    %88 = arith.subf %86, %87 : vector<32x1xf32>
    %cst_43 = arith.constant 0.000000e+00 : f32
    %89 = vector.broadcast %cst_43 : f32 to vector<32x1xf32>
    %90 = arith.maximumf %88, %89 : vector<32x1xf32>
    %cst_44 = arith.constant 9.99999974E-6 : f32
    %91 = vector.broadcast %cst_44 : f32 to vector<32x1xf32>
    %92 = arith.addf %90, %91 : vector<32x1xf32>
    %93 = math.rsqrt %92 : vector<32x1xf32>
    %94 = arith.mulf %75, %93 : vector<32x1xf32>
    %95 = arith.mulf %81, %94 : vector<32x1xf32>
    %96 = arith.subf %77, %95 : vector<32x1xf32>
    %97 = vector.broadcast %94 : vector<32x1xf32> to vector<32x128xf32>
    %98 = arith.mulf %73, %97 : vector<32x128xf32>
    %99 = vector.broadcast %96 : vector<32x1xf32> to vector<32x128xf32>
    %100 = arith.addf %98, %99 : vector<32x128xf32>
    %cst_45 = arith.constant 0.000000e+00 : f32
    %101 = vector.broadcast %cst_45 : f32 to vector<32x128xf32>
    %102 = arith.maximumf %100, %101 : vector<32x128xf32>
    %c1 = arith.constant 1 : index
    %c0_46 = arith.constant 0 : index
    %c0_47 = arith.constant 0 : index
    %103 = vector.load %arg8[%c1, %c0_46, %c0_47] : memref<2x32x32xf32, #tpu.memory_space<vmem>>, vector<1x32x32xf32>
    %104 = vector.shape_cast %103 : vector<1x32x32xf32> to vector<32x32xf32>
    %cst_48 = arith.constant dense<0.000000e+00> : vector<32x128xf32>
    %105 = tpu.matmul %104, %102, %cst_48 {dimension_numbers = #tpu.dot_dimension_numbers<[1], [0], [0], [1], [0, 0, 1, 1], [], []>} : vector<32x32xf32>, vector<32x128xf32>, vector<32x128xf32> -> vector<32x128xf32>
    %c1_49 = arith.constant 1 : index
    %c0_50 = arith.constant 0 : index
    %c0_51 = arith.constant 0 : index
    %106 = vector.load %arg9[%c1_49, %c0_50, %c0_51] : memref<2x32x1xf32, #tpu.memory_space<vmem>>, vector<1x32x1xf32>
    %107 = vector.shape_cast %106 : vector<1x32x1xf32> to vector<32x1xf32>
    %c1_52 = arith.constant 1 : index
    %c0_53 = arith.constant 0 : index
    %c0_54 = arith.constant 0 : index
    %108 = vector.load %arg10[%c1_52, %c0_53, %c0_54] : memref<2x32x1xf32, #tpu.memory_space<vmem>>, vector<1x32x1xf32>
    %109 = vector.shape_cast %108 : vector<1x32x1xf32> to vector<32x1xf32>
    %cst_55 = arith.constant dense<0.000000e+00> : vector<32xf32>
    %110 = vector.multi_reduction <add>, %105, %cst_55 [1] : vector<32x128xf32> to vector<32xf32>
    %111 = vector.shape_cast %110 : vector<32xf32> to vector<32x1xf32>
    %cst_56 = arith.constant 7.812500e-03 : f32
    %112 = vector.broadcast %cst_56 : f32 to vector<32x1xf32>
    %113 = arith.mulf %111, %112 : vector<32x1xf32>
    %114 = arith.mulf %105, %105 : vector<32x128xf32>
    %cst_57 = arith.constant dense<0.000000e+00> : vector<32xf32>
    %115 = vector.multi_reduction <add>, %114, %cst_57 [1] : vector<32x128xf32> to vector<32xf32>
    %116 = vector.shape_cast %115 : vector<32xf32> to vector<32x1xf32>
    %cst_58 = arith.constant 7.812500e-03 : f32
    %117 = vector.broadcast %cst_58 : f32 to vector<32x1xf32>
    %118 = arith.mulf %116, %117 : vector<32x1xf32>
    %119 = arith.mulf %113, %113 : vector<32x1xf32>
    %120 = arith.subf %118, %119 : vector<32x1xf32>
    %cst_59 = arith.constant 0.000000e+00 : f32
    %121 = vector.broadcast %cst_59 : f32 to vector<32x1xf32>
    %122 = arith.maximumf %120, %121 : vector<32x1xf32>
    %cst_60 = arith.constant 9.99999974E-6 : f32
    %123 = vector.broadcast %cst_60 : f32 to vector<32x1xf32>
    %124 = arith.addf %122, %123 : vector<32x1xf32>
    %125 = math.rsqrt %124 : vector<32x1xf32>
    %126 = arith.mulf %107, %125 : vector<32x1xf32>
    %127 = arith.mulf %113, %126 : vector<32x1xf32>
    %128 = arith.subf %109, %127 : vector<32x1xf32>
    %129 = vector.broadcast %126 : vector<32x1xf32> to vector<32x128xf32>
    %130 = arith.mulf %105, %129 : vector<32x128xf32>
    %131 = vector.broadcast %128 : vector<32x1xf32> to vector<32x128xf32>
    %132 = arith.addf %130, %131 : vector<32x128xf32>
    %cst_61 = arith.constant 0.000000e+00 : f32
    %133 = vector.broadcast %cst_61 : f32 to vector<32x128xf32>
    %134 = arith.maximumf %132, %133 : vector<32x128xf32>
    %c0_62 = arith.constant 0 : index
    %c0_63 = arith.constant 0 : index
    %135 = vector.load %arg11[%c0_62, %c0_63] : memref<3x32xf32, #tpu.memory_space<vmem>>, vector<3x32xf32>
    %cst_64 = arith.constant dense<0.000000e+00> : vector<3x128xf32>
    %136 = tpu.matmul %135, %134, %cst_64 {dimension_numbers = #tpu.dot_dimension_numbers<[1], [0], [0], [1], [0, 0, 1, 1], [], []>} : vector<3x32xf32>, vector<32x128xf32>, vector<3x128xf32> -> vector<3x128xf32>
    %c0_65 = arith.constant 0 : index
    %c0_66 = arith.constant 0 : index
    %137 = vector.load %arg12[%c0_65, %c0_66] : memref<3x1xf32, #tpu.memory_space<vmem>>, vector<3x1xf32>
    %138 = vector.broadcast %137 : vector<3x1xf32> to vector<3x128xf32>
    %139 = arith.addf %136, %138 : vector<3x128xf32>
    %140 = math.tanh %139 : vector<3x128xf32>
    %c0_67 = arith.constant 0 : index
    %c0_68 = arith.constant 0 : index
    %141 = vector.load %arg13[%c0_67, %c0_68] : memref<3x128xf32, #tpu.memory_space<vmem>>, vector<3x128xf32>
    tpu.vector_store %arg13[%c0_67, %c0_68], %140 {strides = array<i32>} : memref<3x128xf32, #tpu.memory_space<vmem>>, vector<3x128xf32>,
    return
  }
}

</mosaic_0001>

<llo_original>
// kernel: tpu_custom_call.1
$region0: #{tpu_custom_call.1}
  #allocation0 [shape = 'u32[]', space=smem, size = 0x4, offset = 0x4, fixed_abs, tag = 'smem constant byte address 0x4 - core index']
  #allocation1 [shape = 'u32[144,128]{1,0:T(1,128)}', space=vmem, size = 0x12000, scoped, tag = 'internal scratch']
  %s0 = inlined_call_operand.vmem [shape: f32[2,128], index: 0, kind: input, shape index: {}]
  %s1 = inlined_call_operand.vmem [shape: f32[32,128], index: 1, kind: input, shape index: {}]
  %s2 = inlined_call_operand.vmem [shape: f32[32,2], index: 2, kind: input, shape index: {}]
  %s3 = inlined_call_operand.vmem [shape: f32[32,1], index: 3, kind: input, shape index: {}]
  %s4 = inlined_call_operand.vmem [shape: f32[32,1], index: 4, kind: input, shape index: {}]
  %s5 = inlined_call_operand.vmem [shape: f32[32,32], index: 5, kind: input, shape index: {}]
  %s6 = inlined_call_operand.vmem [shape: f32[32,1], index: 6, kind: input, shape index: {}]
  %s7 = inlined_call_operand.vmem [shape: f32[32,1], index: 7, kind: input, shape index: {}]
  %s8 = inlined_call_operand.vmem [shape: f32[2,32,32], index: 8, kind: input, shape index: {}]
  %s9 = inlined_call_operand.vmem [shape: f32[2,32,1], index: 9, kind: input, shape index: {}]
  %s10 = inlined_call_operand.vmem [shape: f32[2,32,1], index: 10, kind: input, shape index: {}]
  %s11 = inlined_call_operand.vmem [shape: f32[3,32], index: 11, kind: input, shape index: {}]
  %s12 = inlined_call_operand.vmem [shape: f32[3,1], index: 12, kind: input, shape index: {}]
  %s13 = inlined_call_operand.hbm [shape: f32[3,128], index: 13, kind: output, shape index: {}]
  %s14 = sld [smem:[#allocation0]]
  $region62: #{tpu_custom_call.1} parent=0
    _
  %s16 = ssub.s32 1, %s14
  %s17 = scalar_select 0, %s16, %s14
  $region1: #{tpu_custom_call.1} parent=0
    #allocation2 [shape = 'u8[2048]{0}', space=vmem, size = 0x800, scoped, tag = 'output window, operand 0, single buffered']
    #allocation3 [shape = 's32[1]{0}', space=sflag, size = 0x4, scoped, tag = 'scoped memory for tpu_custom_call.1']
    %18 = vsyncpa [#allocation3], 0
    // Predicated region
    $region2: #{tpu_custom_call.1} parent=1 // pred_check
      _
    $region3: #{tpu_custom_call.1} parent=1 // pred_check_branch
      %20 = sbr.rel (0) target = $region5
    $region4: #{tpu_custom_call.1} parent=1 // pred_region
      _
    $region5: #{tpu_custom_call.1} parent=1 // pred_fallthru
      _
    // Predicated region
    $region6: #{tpu_custom_call.1} parent=1 // pred_check
      _
    $region7: #{tpu_custom_call.1} parent=1 // pred_check_branch
      %22 = sbr.rel (0) target = $region9
    $region8: #{tpu_custom_call.1} parent=1 // pred_region
      _
    $region9: #{tpu_custom_call.1} parent=1 // pred_fallthru
      _
    // Predicated region
    $region10: #{tpu_custom_call.1} parent=1 // pred_check
      _
    $region11: #{tpu_custom_call.1} parent=1 // pred_check_branch
      %24 = sbr.rel (0) target = $region13
    $region12: #{tpu_custom_call.1} parent=1 // pred_region
      _
    $region13: #{tpu_custom_call.1} parent=1 // pred_fallthru
      _
    // Predicated region
    $region14: #{tpu_custom_call.1} parent=1 // pred_check
      _
    $region15: #{tpu_custom_call.1} parent=1 // pred_check_branch
      %26 = sbr.rel (0) target = $region17
    $region16: #{tpu_custom_call.1} parent=1 // pred_region
      _
    $region17: #{tpu_custom_call.1} parent=1 // pred_fallthru
      _
    // Predicated region
    $region18: #{tpu_custom_call.1} parent=1 // pred_check
      _
    $region19: #{tpu_custom_call.1} parent=1 // pred_check_branch
      %28 = sbr.rel (0) target = $region21
    $region20: #{tpu_custom_call.1} parent=1 // pred_region
      _
    $region21: #{tpu_custom_call.1} parent=1 // pred_fallthru
      _
    // Predicated region
    $region22: #{tpu_custom_call.1} parent=1 // pred_check
      _
    $region23: #{tpu_custom_call.1} parent=1 // pred_check_branch
      %30 = sbr.rel (0) target = $region25
    $region24: #{tpu_custom_call.1} parent=1 // pred_region
      _
    $region25: #{tpu_custom_call.1} parent=1 // pred_fallthru
      _
    // Predicated region
    $region26: #{tpu_custom_call.1} parent=1 // pred_check
      _
    $region27: #{tpu_custom_call.1} parent=1 // pred_check_branch
      %32 = sbr.rel (0) target = $region29
    $region28: #{tpu_custom_call.1} parent=1 // pred_region
      _
    $region29: #{tpu_custom_call.1} parent=1 // pred_fallthru
      _
    // Predicated region
    $region30: #{tpu_custom_call.1} parent=1 // pred_check
      _
    $region31: #{tpu_custom_call.1} parent=1 // pred_check_branch
      %34 = sbr.rel (0) target = $region33
    $region32: #{tpu_custom_call.1} parent=1 // pred_region
      _
    $region33: #{tpu_custom_call.1} parent=1 // pred_fallthru
      _
    // Predicated region
    $region34: #{tpu_custom_call.1} parent=1 // pred_check
      _
    $region35: #{tpu_custom_call.1} parent=1 // pred_check_branch
      %36 = sbr.rel (0) target = $region37
    $region36: #{tpu_custom_call.1} parent=1 // pred_region
      _
    $region37: #{tpu_custom_call.1} parent=1 // pred_fallthru
      _
    // Predicated region
    $region38: #{tpu_custom_call.1} parent=1 // pred_check
      _
    $region39: #{tpu_custom_call.1} parent=1 // pred_check_branch
      %38 = sbr.rel (0) target = $region41
    $region40: #{tpu_custom_call.1} parent=1 // pred_region
      _
    $region41: #{tpu_custom_call.1} parent=1 // pred_fallthru
      _
    // Predicated region
    $region42: #{tpu_custom_call.1} parent=1 // pred_check
      _
    $region43: #{tpu_custom_call.1} parent=1 // pred_check_branch
      %40 = sbr.rel (0) target = $region45
    $region44: #{tpu_custom_call.1} parent=1 // pred_region
      _
    $region45: #{tpu_custom_call.1} parent=1 // pred_fallthru
      _
    // Predicated region
    $region46: #{tpu_custom_call.1} parent=1 // pred_check
      _
    $region47: #{tpu_custom_call.1} parent=1 // pred_check_branch
      %42 = sbr.rel (0) target = $region49
    $region48: #{tpu_custom_call.1} parent=1 // pred_region
      _
    $region49: #{tpu_custom_call.1} parent=1 // pred_fallthru
      _
    // Predicated region
    $region50: #{tpu_custom_call.1} parent=1 // pred_check
      _
    $region51: #{tpu_custom_call.1} parent=1 // pred_check_branch
      %44 = sbr.rel (0) target = $region53
    $region52: #{tpu_custom_call.1} parent=1 // pred_region
      _
    $region53: #{tpu_custom_call.1} parent=1 // pred_fallthru
      _
    %v45 = vld [vmem:[%s0] sm:$0x3]
    %v46 = vld [vmem:[%s2] sm:$0xff]
    %v47 = vld [vmem:[%s2 + $0x8] sm:$0xff]
    %v48 = vld [vmem:[%s2 + $0x10] sm:$0xff]
    %v49 = vld [vmem:[%s2 + $0x18] sm:$0xff]
    %v50 = vld [vmem:[%s1] sm:$0xff]
    %v51 = vld [vmem:[%s1 + $0x8] sm:$0xff]
    %v52 = vld [vmem:[%s1 + $0x10] sm:$0xff]
    %v53 = vld [vmem:[%s1 + $0x18] sm:$0xff]
    %55 = vset.pattern.permute.xlu0 0
    %56 = vperm.xlu0 %55, %v46
    %v57 = vpop.permute.xlu0 %56
    %60 = vset.pattern.permute.xlu0 0
    %61 = vperm.xlu0 %60, %v47
    %v62 = vpop.permute.xlu0 %61
    %65 = vset.pattern.permute.xlu0 0
    %66 = vperm.xlu0 %65, %v48
    %v67 = vpop.permute.xlu0 %66
    %70 = vset.pattern.permute.xlu0 0
    %71 = vperm.xlu0 %70, %v49
    %v72 = vpop.permute.xlu0 %71
    %v74 = vlaneseq
    %v75 = vshrl.u32 %v74, 7
    %v76 = vsub.s32 0, %v75
    %v77 = vrot.slane %v45, %v76
    %v78 = vmul.f32 %v57, %v77
    %v79 = vmul.f32 %v62, %v77
    %v80 = vmul.f32 %v67, %v77
    %v81 = vmul.f32 %v72, %v77
    %v82 = vadd.f32 %v50, %v78
    %v83 = vadd.f32 %v51, %v79
    %v84 = vadd.f32 %v52, %v80
    %v85 = vadd.f32 %v53, %v81
    %86 = vset.pattern.permute.xlu0 1
    %87 = vperm.xlu0 %86, %v46
    %v88 = vpop.permute.xlu0 %87
    %90 = vset.pattern.permute.xlu0 1
    %91 = vperm.xlu0 %90, %v47
    %v92 = vpop.permute.xlu0 %91
    %94 = vset.pattern.permute.xlu0 1
    %95 = vperm.xlu0 %94, %v48
    %v96 = vpop.permute.xlu0 %95
    %98 = vset.pattern.permute.xlu0 1
    %99 = vperm.xlu0 %98, %v49
    %v100 = vpop.permute.xlu0 %99
    %v102 = vlaneseq
    %v103 = vshrl.u32 %v102, 7
    %v104 = vsub.s32 1, %v103
    %v105 = vrot.slane %v45, %v104
    %v106 = vmul.f32 %v88, %v105
    %v107 = vmul.f32 %v92, %v105
    %v108 = vmul.f32 %v96, %v105
    %v109 = vmul.f32 %v100, %v105
    %v110 = vadd.f32 %v82, %v106
    %v111 = vadd.f32 %v83, %v107
    %v112 = vadd.f32 %v84, %v108
    %v113 = vadd.f32 %v85, %v109
    %v114 = vld [vmem:[%s3] sm:$0xff]
    %v115 = vld [vmem:[%s3 + $0x8] sm:$0xff]
    %v116 = vld [vmem:[%s3 + $0x10] sm:$0xff]
    %v117 = vld [vmem:[%s3 + $0x18] sm:$0xff]
    %v118 = vld [vmem:[%s4] sm:$0xff]
    %v119 = vld [vmem:[%s4 + $0x8] sm:$0xff]
    %v120 = vld [vmem:[%s4 + $0x10] sm:$0xff]
    %v121 = vld [vmem:[%s4 + $0x18] sm:$0xff]
    %122 = vadd.xlane.f32.xlu0 %v110
    %v123 = vpop.xlane.xlu0 %122
    %124 = vadd.xlane.f32.xlu0 %v111
    %v125 = vpop.xlane.xlu0 %124
    %126 = vadd.xlane.f32.xlu0 %v112
    %v127 = vpop.xlane.xlu0 %126
    %128 = vadd.xlane.f32.xlu0 %v113
    %v129 = vpop.xlane.xlu0 %128
    %v130 = vmul.f32 %v123, 0.0078125
    %v131 = vmul.f32 %v125, 0.0078125
    %v132 = vmul.f32 %v127, 0.0078125
    %v133 = vmul.f32 %v129, 0.0078125
    %v134 = vmul.f32 %v110, %v110
    %v135 = vmul.f32 %v111, %v111
    %v136 = vmul.f32 %v112, %v112
    %v137 = vmul.f32 %v113, %v113
    %138 = vadd.xlane.f32.xlu0 %v134
    %v139 = vpop.xlane.xlu0 %138
    %140 = vadd.xlane.f32.xlu0 %v135
    %v141 = vpop.xlane.xlu0 %140
    %142 = vadd.xlane.f32.xlu0 %v136
    %v143 = vpop.xlane.xlu0 %142
    %144 = vadd.xlane.f32.xlu0 %v137
    %v145 = vpop.xlane.xlu0 %144
    %v146 = vmul.f32 %v139, 0.0078125
    %v147 = vmul.f32 %v141, 0.0078125
    %v148 = vmul.f32 %v143, 0.0078125
    %v149 = vmul.f32 %v145, 0.0078125
    %v150 = vmul.f32 %v130, %v130
    %v151 = vmul.f32 %v131, %v131
    %v152 = vmul.f32 %v132, %v132
    %v153 = vmul.f32 %v133, %v133
    %v154 = vsub.f32 %v146, %v150
    %v155 = vsub.f32 %v147, %v151
    %v156 = vsub.f32 %v148, %v152
    %v157 = vsub.f32 %v149, %v153
    %v158 = vmax.f32 %v154, 0.0
    %v159 = vmax.f32 %v155, 0.0
    %v160 = vmax.f32 %v156, 0.0
    %v161 = vmax.f32 %v157, 0.0
    %v162 = vadd.f32 %v158, 1e-05
    %v163 = vadd.f32 %v159, 1e-05
    %v164 = vadd.f32 %v160, 1e-05
    %v165 = vadd.f32 %v161, 1e-05
    %v166 = vrsqrt.pop %v162
    %v167 = vrsqrt.pop %v163
    %v168 = vrsqrt.pop %v164
    %v169 = vrsqrt.pop %v165
    %v170 = vmul.f32 %v114, %v166
    %v171 = vmul.f32 %v115, %v167
    %v172 = vmul.f32 %v116, %v168
    %v173 = vmul.f32 %v117, %v169
    %v174 = vmul.f32 %v130, %v170
    %v175 = vmul.f32 %v131, %v171
    %v176 = vmul.f32 %v132, %v172
    %v177 = vmul.f32 %v133, %v173
    %v178 = vsub.f32 %v118, %v174
    %v179 = vsub.f32 %v119, %v175
    %v180 = vsub.f32 %v120, %v176
    %v181 = vsub.f32 %v121, %v177
    %183 = vset.pattern.permute.xlu0 0
    %184 = vperm.xlu0 %183, %v170
    %v185 = vpop.permute.xlu0 %184
    %188 = vset.pattern.permute.xlu0 0
    %189 = vperm.xlu0 %188, %v171
    %v190 = vpop.permute.xlu0 %189
    %193 = vset.pattern.permute.xlu0 0
    %194 = vperm.xlu0 %193, %v172
    %v195 = vpop.permute.xlu0 %194
    %198 = vset.pattern.permute.xlu0 0
    %199 = vperm.xlu0 %198, %v173
    %v200 = vpop.permute.xlu0 %199
    %v202 = vmul.f32 %v110, %v185
    %v203 = vmul.f32 %v111, %v190
    %v204 = vmul.f32 %v112, %v195
    %v205 = vmul.f32 %v113, %v200
    %207 = vset.pattern.permute.xlu0 0
    %208 = vperm.xlu0 %207, %v178
    %v209 = vpop.permute.xlu0 %208
    %212 = vset.pattern.permute.xlu0 0
    %213 = vperm.xlu0 %212, %v179
    %v214 = vpop.permute.xlu0 %213
    %217 = vset.pattern.permute.xlu0 0
    %218 = vperm.xlu0 %217, %v180
    %v219 = vpop.permute.xlu0 %218
    %222 = vset.pattern.permute.xlu0 0
    %223 = vperm.xlu0 %222, %v181
    %v224 = vpop.permute.xlu0 %223
    %v226 = vadd.f32 %v202, %v209
    %v227 = vadd.f32 %v203, %v214
    %v228 = vadd.f32 %v204, %v219
    %v229 = vadd.f32 %v205, %v224
    %v230 = vmax.f32 %v226, 0.0
    %v231 = vmax.f32 %v227, 0.0
    %v232 = vmax.f32 %v228, 0.0
    %v233 = vmax.f32 %v229, 0.0
    %v234 = vld [vmem:[%s5] sm:$0xff]
    %v235 = vld [vmem:[%s5 + $0x8] sm:$0xff]
    %v236 = vld [vmem:[%s5 + $0x10] sm:$0xff]
    %v237 = vld [vmem:[%s5 + $0x18] sm:$0xff]
    %vm238 = vcmask 261120
    %v240 = vsel %vm238, %v234, 0
    %v243 = vsel %vm238, %v235, 0
    %v246 = vsel %vm238, %v236, 0
    %v249 = vsel %vm238, %v237, 0
    %251 = vmatprep.subr.mxu0 0.0
    %252 = vmatpush1.msra.mxu0 %v230
    %253 = vmatprep.subr.mxu0 0.0
    %254 = vmatpush1.msra.mxu0 %v231
    %255 = vmatprep.subr.mxu0 0.0
    %256 = vmatpush1.msra.mxu0 %v232
    %257 = vmatprep.subr.mxu0 0.0
    %258 = vmatpush1.msra.mxu0 %v233
    %259 = vmatprep.subr.mxu0 0.0
    %260 = vmatpush1.msra.mxu0 0.0
    %261 = vmatprep.subr.mxu0 0.0
    %262 = vmatpush1.msra.mxu0 0.0
    %263 = vmatprep.subr.mxu0 0.0
    %264 = vmatpush1.msra.mxu0 0.0
    %265 = vmatprep.subr.mxu0 0.0
    %266 = vmatpush1.msra.mxu0 0.0
    %267 = vmatprep.subr.mxu0 0.0
    %268 = vmatpush1.msra.mxu0 0.0
    %269 = vmatprep.subr.mxu0 0.0
    %270 = vmatpush1.msra.mxu0 0.0
    %271 = vmatprep.subr.mxu0 0.0
    %272 = vmatpush1.msra.mxu0 0.0
    %273 = vmatprep.subr.mxu0 0.0
    %274 = vmatpush1.msra.mxu0 0.0
    %275 = vmatprep.subr.mxu0 0.0
    %276 = vmatpush1.msra.mxu0 0.0
    %277 = vmatprep.subr.mxu0 0.0
    %278 = vmatpush1.msra.mxu0 0.0
    %279 = vmatprep.subr.mxu0 0.0
    %280 = vmatpush1.msra.mxu0 0.0
    %281 = vmatprep.subr.mxu0 0.0
    %282 = vmatpush1.msra.mxu0 0.0
    %283 = vmatprep.subr.mxu0 0.0
    %284 = vmatpush1.msra.mxu0 0.0
    %285 = vmatprep.subr.mxu0 0.0
    %286 = vmatpush1.msra.mxu0 0.0
    %287 = vmatprep.subr.mxu0 0.0
    %288 = vmatpush1.msra.mxu0 0.0
    %289 = vmatprep.subr.mxu0 0.0
    %290 = vmatpush1.msra.mxu0 0.0
    %291 = vmatprep.subr.mxu0 0.0
    %292 = vmatpush1.msra.mxu0 0.0
    %293 = vmatprep.subr.mxu0 0.0
    %294 = vmatpush1.msra.mxu0 0.0
    %295 = vmatprep.subr.mxu0 0.0
    %296 = vmatpush1.msra.mxu0 0.0
    %297 = vmatprep.subr.mxu0 0.0
    %298 = vmatpush1.msra.mxu0 0.0
    %299 = vmatprep.subr.mxu0 0.0
    %300 = vmatpush1.msra.mxu0 0.0
    %301 = vmatprep.subr.mxu0 0.0
    %302 = vmatpush1.msra.mxu0 0.0
    %303 = vmatprep.subr.mxu0 0.0
    %304 = vmatpush1.msra.mxu0 0.0
    %305 = vmatprep.subr.mxu0 0.0
    %306 = vmatpush1.msra.mxu0 0.0
    %307 = vmatprep.subr.mxu0 0.0
    %308 = vmatpush1.msra.mxu0 0.0
    %309 = vmatprep.subr.mxu0 0.0
    %310 = vmatpush1.msra.mxu0 0.0
    %311 = vmatprep.subr.mxu0 0.0
    %312 = vmatpush1.msra.mxu0 0.0
    %313 = vmatprep.subr.mxu0 0.0
    %314 = vmatpush1.msra.mxu0 0.0
    %315 = vmatprep.mubr.f32.mxu0 0.0
    %316 = vmatmul.mubr.f32.gmra.mrb[0].mxu0 %v240
    %v317 = vpop.f32.mrb[0].mxu0
    %v318 = vadd.f32 0.0, %v317
    %v319 = vpop.f32.mrb[0].mxu0
    %320 = vmatprep.mubr.f32.mxu0 0.0
    %321 = vmatmul.mubr.f32.gmra.mrb[0].mxu0 %v243
    %v322 = vpop.f32.mrb[0].mxu0
    %v323 = vadd.f32 0.0, %v322
    %v324 = vpop.f32.mrb[0].mxu0
    %325 = vmatprep.mubr.f32.mxu0 0.0
    %326 = vmatmul.mubr.f32.gmra.mrb[0].mxu0 %v246
    %v327 = vpop.f32.mrb[0].mxu0
    %v328 = vadd.f32 0.0, %v327
    %v329 = vpop.f32.mrb[0].mxu0
    %330 = vmatprep.mubr.f32.mxu0 0.0
    %331 = vmatmul.mubr.f32.gmra.mrb[0].mxu0 %v249
    %v332 = vpop.f32.mrb[0].mxu0
    %v333 = vadd.f32 0.0, %v332
    %v334 = vpop.f32.mrb[0].mxu0
    %335 = vdwg.mxu0
    %v336 = vld [vmem:[%s6] sm:$0xff]
    %v337 = vld [vmem:[%s6 + $0x8] sm:$0xff]
    %v338 = vld [vmem:[%s6 + $0x10] sm:$0xff]
    %v339 = vld [vmem:[%s6 + $0x18] sm:$0xff]
    %v340 = vld [vmem:[%s7] sm:$0xff]
    %v341 = vld [vmem:[%s7 + $0x8] sm:$0xff]
    %v342 = vld [vmem:[%s7 + $0x10] sm:$0xff]
    %v343 = vld [vmem:[%s7 + $0x18] sm:$0xff]
    %344 = vadd.xlane.f32.xlu0 %v318
    %v345 = vpop.xlane.xlu0 %344
    %346 = vadd.xlane.f32.xlu0 %v323
    %v347 = vpop.xlane.xlu0 %346
    %348 = vadd.xlane.f32.xlu0 %v328
    %v349 = vpop.xlane.xlu0 %348
    %350 = vadd.xlane.f32.xlu0 %v333
    %v351 = vpop.xlane.xlu0 %350
    %v352 = vmul.f32 %v345, 0.0078125
    %v353 = vmul.f32 %v347, 0.0078125
    %v354 = vmul.f32 %v349, 0.0078125
    %v355 = vmul.f32 %v351, 0.0078125
    %v356 = vmul.f32 %v318, %v318
    %v357 = vmul.f32 %v323, %v323
    %v358 = vmul.f32 %v328, %v328
    %v359 = vmul.f32 %v333, %v333
    %360 = vadd.xlane.f32.xlu0 %v356
    %v361 = vpop.xlane.xlu0 %360
    %362 = vadd.xlane.f32.xlu0 %v357
    %v363 = vpop.xlane.xlu0 %362
    %364 = vadd.xlane.f32.xlu0 %v358
    %v365 = vpop.xlane.xlu0 %364
    %366 = vadd.xlane.f32.xlu0 %v359
    %v367 = vpop.xlane.xlu0 %366
    %v368 = vmul.f32 %v361, 0.0078125
    %v369 = vmul.f32 %v363, 0.0078125
    %v370 = vmul.f32 %v365, 0.0078125
    %v371 = vmul.f32 %v367, 0.0078125
    %v372 = vmul.f32 %v352, %v352
    %v373 = vmul.f32 %v353, %v353
    %v374 = vmul.f32 %v354, %v354
    %v375 = vmul.f32 %v355, %v355
    %v376 = vsub.f32 %v368, %v372
    %v377 = vsub.f32 %v369, %v373
    %v378 = vsub.f32 %v370, %v374
    %v379 = vsub.f32 %v371, %v375
    %v380 = vmax.f32 %v376, 0.0
    %v381 = vmax.f32 %v377, 0.0
    %v382 = vmax.f32 %v378, 0.0
    %v383 = vmax.f32 %v379, 0.0
    %v384 = vadd.f32 %v380, 1e-05
    %v385 = vadd.f32 %v381, 1e-05
    %v386 = vadd.f32 %v382, 1e-05
    %v387 = vadd.f32 %v383, 1e-05
    %v388 = vrsqrt.pop %v384
    %v389 = vrsqrt.pop %v385
    %v390 = vrsqrt.pop %v386
    %v391 = vrsqrt.pop %v387
    %v392 = vmul.f32 %v336, %v388
    %v393 = vmul.f32 %v337, %v389
    %v394 = vmul.f32 %v338, %v390
    %v395 = vmul.f32 %v339, %v391
    %v396 = vmul.f32 %v352, %v392
    %v397 = vmul.f32 %v353, %v393
    %v398 = vmul.f32 %v354, %v394
    %v399 = vmul.f32 %v355, %v395
    %v400 = vsub.f32 %v340, %v396
    %v401 = vsub.f32 %v341, %v397
    %v402 = vsub.f32 %v342, %v398
    %v403 = vsub.f32 %v343, %v399
    %405 = vset.pattern.permute.xlu0 0
    %406 = vperm.xlu0 %405, %v392
    %v407 = vpop.permute.xlu0 %406
    %410 = vset.pattern.permute.xlu0 0
    %411 = vperm.xlu0 %410, %v393
    %v412 = vpop.permute.xlu0 %411
    %415 = vset.pattern.permute.xlu0 0
    %416 = vperm.xlu0 %415, %v394
    %v417 = vpop.permute.xlu0 %416
    %420 = vset.pattern.permute.xlu0 0
    %421 = vperm.xlu0 %420, %v395
    %v422 = vpop.permute.xlu0 %421
    %v424 = vmul.f32 %v318, %v407
    %v425 = vmul.f32 %v323, %v412
    %v426 = vmul.f32 %v328, %v417
    %v427 = vmul.f32 %v333, %v422
    %429 = vset.pattern.permute.xlu0 0
    %430 = vperm.xlu0 %429, %v400
    %v431 = vpop.permute.xlu0 %430
    %434 = vset.pattern.permute.xlu0 0
    %435 = vperm.xlu0 %434, %v401
    %v436 = vpop.permute.xlu0 %435
    %439 = vset.pattern.permute.xlu0 0
    %440 = vperm.xlu0 %439, %v402
    %v441 = vpop.permute.xlu0 %440
    %444 = vset.pattern.permute.xlu0 0
    %445 = vperm.xlu0 %444, %v403
    %v446 = vpop.permute.xlu0 %445
    %v448 = vadd.f32 %v424, %v431
    %v449 = vadd.f32 %v425, %v436
    %v450 = vadd.f32 %v426, %v441
    %v451 = vadd.f32 %v427, %v446
    %v452 = vmax.f32 %v448, 0.0
    %v453 = vmax.f32 %v449, 0.0
    %v454 = vmax.f32 %v450, 0.0
    %v455 = vmax.f32 %v451, 0.0
    %v456 = vld [vmem:[%s8] sm:$0xff]
    %v457 = vld [vmem:[%s8 + $0x8] sm:$0xff]
    %v458 = vld [vmem:[%s8 + $0x10] sm:$0xff]
    %v459 = vld [vmem:[%s8 + $0x18] sm:$0xff]
    %v461 = vsel %vm238, %v456, 0
    %v464 = vsel %vm238, %v457, 0
    %v467 = vsel %vm238, %v458, 0
    %v470 = vsel %vm238, %v459, 0
    %472 = vmatprep.subr.mxu0 0.0
    %473 = vmatpush1.msra.mxu0 %v452
    %474 = vmatprep.subr.mxu0 0.0
    %475 = vmatpush1.msra.mxu0 %v453
    %476 = vmatprep.subr.mxu0 0.0
    %477 = vmatpush1.msra.mxu0 %v454
    %478 = vmatprep.subr.mxu0 0.0
    %479 = vmatpush1.msra.mxu0 %v455
    %480 = vmatprep.subr.mxu0 0.0
    %481 = vmatpush1.msra.mxu0 0.0
    %482 = vmatprep.subr.mxu0 0.0
    %483 = vmatpush1.msra.mxu0 0.0
    %484 = vmatprep.subr.mxu0 0.0
    %485 = vmatpush1.msra.mxu0 0.0
    %486 = vmatprep.subr.mxu0 0.0
    %487 = vmatpush1.msra.mxu0 0.0
    %488 = vmatprep.subr.mxu0 0.0
    %489 = vmatpush1.msra.mxu0 0.0
    %490 = vmatprep.subr.mxu0 0.0
    %491 = vmatpush1.msra.mxu0 0.0
    %492 = vmatprep.subr.mxu0 0.0
    %493 = vmatpush1.msra.mxu0 0.0
    %494 = vmatprep.subr.mxu0 0.0
    %495 = vmatpush1.msra.mxu0 0.0
    %496 = vmatprep.subr.mxu0 0.0
    %497 = vmatpush1.msra.mxu0 0.0
    %498 = vmatprep.subr.mxu0 0.0
    %499 = vmatpush1.msra.mxu0 0.0
    %500 = vmatprep.subr.mxu0 0.0
    %501 = vmatpush1.msra.mxu0 0.0
    %502 = vmatprep.subr.mxu0 0.0
    %503 = vmatpush1.msra.mxu0 0.0
    %504 = vmatprep.subr.mxu0 0.0
    %505 = vmatpush1.msra.mxu0 0.0
    %506 = vmatprep.subr.mxu0 0.0
    %507 = vmatpush1.msra.mxu0 0.0
    %508 = vmatprep.subr.mxu0 0.0
    %509 = vmatpush1.msra.mxu0 0.0
    %510 = vmatprep.subr.mxu0 0.0
    %511 = vmatpush1.msra.mxu0 0.0
    %512 = vmatprep.subr.mxu0 0.0
    %513 = vmatpush1.msra.mxu0 0.0
    %514 = vmatprep.subr.mxu0 0.0
    %515 = vmatpush1.msra.mxu0 0.0
    %516 = vmatprep.subr.mxu0 0.0
    %517 = vmatpush1.msra.mxu0 0.0
    %518 = vmatprep.subr.mxu0 0.0
    %519 = vmatpush1.msra.mxu0 0.0
    %520 = vmatprep.subr.mxu0 0.0
    %521 = vmatpush1.msra.mxu0 0.0
    %522 = vmatprep.subr.mxu0 0.0
    %523 = vmatpush1.msra.mxu0 0.0
    %524 = vmatprep.subr.mxu0 0.0
    %525 = vmatpush1.msra.mxu0 0.0
    %526 = vmatprep.subr.mxu0 0.0
    %527 = vmatpush1.msra.mxu0 0.0
    %528 = vmatprep.subr.mxu0 0.0
    %529 = vmatpush1.msra.mxu0 0.0
    %530 = vmatprep.subr.mxu0 0.0
    %531 = vmatpush1.msra.mxu0 0.0
    %532 = vmatprep.subr.mxu0 0.0
    %533 = vmatpush1.msra.mxu0 0.0
    %534 = vmatprep.subr.mxu0 0.0
    %535 = vmatpush1.msra.mxu0 0.0
    %536 = vmatprep.mubr.f32.mxu0 0.0
    %537 = vmatmul.mubr.f32.gmra.mrb[0].mxu0 %v461
    %v538 = vpop.f32.mrb[0].mxu0
    %v539 = vadd.f32 0.0, %v538
    %v540 = vpop.f32.mrb[0].mxu0
    %541 = vmatprep.mubr.f32.mxu0 0.0
    %542 = vmatmul.mubr.f32.gmra.mrb[0].mxu0 %v464
    %v543 = vpop.f32.mrb[0].mxu0
    %v544 = vadd.f32 0.0, %v543
    %v545 = vpop.f32.mrb[0].mxu0
    %546 = vmatprep.mubr.f32.mxu0 0.0
    %547 = vmatmul.mubr.f32.gmra.mrb[0].mxu0 %v467
    %v548 = vpop.f32.mrb[0].mxu0
    %v549 = vadd.f32 0.0, %v548
    %v550 = vpop.f32.mrb[0].mxu0
    %551 = vmatprep.mubr.f32.mxu0 0.0
    %552 = vmatmul.mubr.f32.gmra.mrb[0].mxu0 %v470
    %v553 = vpop.f32.mrb[0].mxu0
    %v554 = vadd.f32 0.0, %v553
    %v555 = vpop.f32.mrb[0].mxu0
    %556 = vdwg.mxu0
    %v557 = vld [vmem:[%s9] sm:$0xff]
    %v558 = vld [vmem:[%s9 + $0x8] sm:$0xff]
    %v559 = vld [vmem:[%s9 + $0x10] sm:$0xff]
    %v560 = vld [vmem:[%s9 + $0x18] sm:$0xff]
    %v561 = vld [vmem:[%s10] sm:$0xff]
    %v562 = vld [vmem:[%s10 + $0x8] sm:$0xff]
    %v563 = vld [vmem:[%s10 + $0x10] sm:$0xff]
    %v564 = vld [vmem:[%s10 + $0x18] sm:$0xff]
    %565 = vadd.xlane.f32.xlu0 %v539
    %v566 = vpop.xlane.xlu0 %565
    %567 = vadd.xlane.f32.xlu0 %v544
    %v568 = vpop.xlane.xlu0 %567
    %569 = vadd.xlane.f32.xlu0 %v549
    %v570 = vpop.xlane.xlu0 %569
    %571 = vadd.xlane.f32.xlu0 %v554
    %v572 = vpop.xlane.xlu0 %571
    %v573 = vmul.f32 %v566, 0.0078125
    %v574 = vmul.f32 %v568, 0.0078125
    %v575 = vmul.f32 %v570, 0.0078125
    %v576 = vmul.f32 %v572, 0.0078125
    %v577 = vmul.f32 %v539, %v539
    %v578 = vmul.f32 %v544, %v544
    %v579 = vmul.f32 %v549, %v549
    %v580 = vmul.f32 %v554, %v554
    %581 = vadd.xlane.f32.xlu0 %v577
    %v582 = vpop.xlane.xlu0 %581
    %583 = vadd.xlane.f32.xlu0 %v578
    %v584 = vpop.xlane.xlu0 %583
    %585 = vadd.xlane.f32.xlu0 %v579
    %v586 = vpop.xlane.xlu0 %585
    %587 = vadd.xlane.f32.xlu0 %v580
    %v588 = vpop.xlane.xlu0 %587
    %v589 = vmul.f32 %v582, 0.0078125
    %v590 = vmul.f32 %v584, 0.0078125
    %v591 = vmul.f32 %v586, 0.0078125
    %v592 = vmul.f32 %v588, 0.0078125
    %v593 = vmul.f32 %v573, %v573
    %v594 = vmul.f32 %v574, %v574
    %v595 = vmul.f32 %v575, %v575
    %v596 = vmul.f32 %v576, %v576
    %v597 = vsub.f32 %v589, %v593
    %v598 = vsub.f32 %v590, %v594
    %v599 = vsub.f32 %v591, %v595
    %v600 = vsub.f32 %v592, %v596
    %v601 = vmax.f32 %v597, 0.0
    %v602 = vmax.f32 %v598, 0.0
    %v603 = vmax.f32 %v599, 0.0
    %v604 = vmax.f32 %v600, 0.0
    %v605 = vadd.f32 %v601, 1e-05
    %v606 = vadd.f32 %v602, 1e-05
    %v607 = vadd.f32 %v603, 1e-05
    %v608 = vadd.f32 %v604, 1e-05
    %v609 = vrsqrt.pop %v605
    %v610 = vrsqrt.pop %v606
    %v611 = vrsqrt.pop %v607
    %v612 = vrsqrt.pop %v608
    %v613 = vmul.f32 %v557, %v609
    %v614 = vmul.f32 %v558, %v610
    %v615 = vmul.f32 %v559, %v611
    %v616 = vmul.f32 %v560, %v612
    %v617 = vmul.f32 %v573, %v613
    %v618 = vmul.f32 %v574, %v614
    %v619 = vmul.f32 %v575, %v615
    %v620 = vmul.f32 %v576, %v616
    %v621 = vsub.f32 %v561, %v617
    %v622 = vsub.f32 %v562, %v618
    %v623 = vsub.f32 %v563, %v619
    %v624 = vsub.f32 %v564, %v620
    %626 = vset.pattern.permute.xlu0 0
    %627 = vperm.xlu0 %626, %v613
    %v628 = vpop.permute.xlu0 %627
    %631 = vset.pattern.permute.xlu0 0
    %632 = vperm.xlu0 %631, %v614
    %v633 = vpop.permute.xlu0 %632
    %636 = vset.pattern.permute.xlu0 0
    %637 = vperm.xlu0 %636, %v615
    %v638 = vpop.permute.xlu0 %637
    %641 = vset.pattern.permute.xlu0 0
    %642 = vperm.xlu0 %641, %v616
    %v643 = vpop.permute.xlu0 %642
    %v645 = vmul.f32 %v539, %v628
    %v646 = vmul.f32 %v544, %v633
    %v647 = vmul.f32 %v549, %v638
    %v648 = vmul.f32 %v554, %v643
    %650 = vset.pattern.permute.xlu0 0
    %651 = vperm.xlu0 %650, %v621
    %v652 = vpop.permute.xlu0 %651
    %655 = vset.pattern.permute.xlu0 0
    %656 = vperm.xlu0 %655, %v622
    %v657 = vpop.permute.xlu0 %656
    %660 = vset.pattern.permute.xlu0 0
    %661 = vperm.xlu0 %660, %v623
    %v662 = vpop.permute.xlu0 %661
    %665 = vset.pattern.permute.xlu0 0
    %666 = vperm.xlu0 %665, %v624
    %v667 = vpop.permute.xlu0 %666
    %v669 = vadd.f32 %v645, %v652
    %v670 = vadd.f32 %v646, %v657
    %v671 = vadd.f32 %v647, %v662
    %v672 = vadd.f32 %v648, %v667
    %v673 = vmax.f32 %v669, 0.0
    %v674 = vmax.f32 %v670, 0.0
    %v675 = vmax.f32 %v671, 0.0
    %v676 = vmax.f32 %v672, 0.0
    %s677 = scalar_lea.vmem %s8, 32
    %v678 = vld [vmem:[%s677] sm:$0xff]
    %v679 = vld [vmem:[%s677 + $0x8] sm:$0xff]
    %v680 = vld [vmem:[%s677 + $0x10] sm:$0xff]
    %v681 = vld [vmem:[%s677 + $0x18] sm:$0xff]
    %v683 = vsel %vm238, %v678, 0
    %v686 = vsel %vm238, %v679, 0
    %v689 = vsel %vm238, %v680, 0
    %v692 = vsel %vm238, %v681, 0
    %694 = vmatprep.subr.mxu0 0.0
    %695 = vmatpush1.msra.mxu0 %v673
    %696 = vmatprep.subr.mxu0 0.0
    %697 = vmatpush1.msra.mxu0 %v674
    %698 = vmatprep.subr.mxu0 0.0
    %699 = vmatpush1.msra.mxu0 %v675
    %700 = vmatprep.subr.mxu0 0.0
    %701 = vmatpush1.msra.mxu0 %v676
    %702 = vmatprep.subr.mxu0 0.0
    %703 = vmatpush1.msra.mxu0 0.0
    %704 = vmatprep.subr.mxu0 0.0
    %705 = vmatpush1.msra.mxu0 0.0
    %706 = vmatprep.subr.mxu0 0.0
    %707 = vmatpush1.msra.mxu0 0.0
    %708 = vmatprep.subr.mxu0 0.0
    %709 = vmatpush1.msra.mxu0 0.0
    %710 = vmatprep.subr.mxu0 0.0
    %711 = vmatpush1.msra.mxu0 0.0
    %712 = vmatprep.subr.mxu0 0.0
    %713 = vmatpush1.msra.mxu0 0.0
    %714 = vmatprep.subr.mxu0 0.0
    %715 = vmatpush1.msra.mxu0 0.0
    %716 = vmatprep.subr.mxu0 0.0
    %717 = vmatpush1.msra.mxu0 0.0
    %718 = vmatprep.subr.mxu0 0.0
    %719 = vmatpush1.msra.mxu0 0.0
    %720 = vmatprep.subr.mxu0 0.0
    %721 = vmatpush1.msra.mxu0 0.0
    %722 = vmatprep.subr.mxu0 0.0
    %723 = vmatpush1.msra.mxu0 0.0
    %724 = vmatprep.subr.mxu0 0.0
    %725 = vmatpush1.msra.mxu0 0.0
    %726 = vmatprep.subr.mxu0 0.0
    %727 = vmatpush1.msra.mxu0 0.0
    %728 = vmatprep.subr.mxu0 0.0
    %729 = vmatpush1.msra.mxu0 0.0
    %730 = vmatprep.subr.mxu0 0.0
    %731 = vmatpush1.msra.mxu0 0.0
    %732 = vmatprep.subr.mxu0 0.0
    %733 = vmatpush1.msra.mxu0 0.0
    %734 = vmatprep.subr.mxu0 0.0
    %735 = vmatpush1.msra.mxu0 0.0
    %736 = vmatprep.subr.mxu0 0.0
    %737 = vmatpush1.msra.mxu0 0.0
    %738 = vmatprep.subr.mxu0 0.0
    %739 = vmatpush1.msra.mxu0 0.0
    %740 = vmatprep.subr.mxu0 0.0
    %741 = vmatpush1.msra.mxu0 0.0
    %742 = vmatprep.subr.mxu0 0.0
    %743 = vmatpush1.msra.mxu0 0.0
    %744 = vmatprep.subr.mxu0 0.0
    %745 = vmatpush1.msra.mxu0 0.0
    %746 = vmatprep.subr.mxu0 0.0
    %747 = vmatpush1.msra.mxu0 0.0
    %748 = vmatprep.subr.mxu0 0.0
    %749 = vmatpush1.msra.mxu0 0.0
    %750 = vmatprep.subr.mxu0 0.0
    %751 = vmatpush1.msra.mxu0 0.0
    %752 = vmatprep.subr.mxu0 0.0
    %753 = vmatpush1.msra.mxu0 0.0
    %754 = vmatprep.subr.mxu0 0.0
    %755 = vmatpush1.msra.mxu0 0.0
    %756 = vmatprep.subr.mxu0 0.0
    %757 = vmatpush1.msra.mxu0 0.0
    %758 = vmatprep.mubr.f32.mxu0 0.0
    %759 = vmatmul.mubr.f32.gmra.mrb[0].mxu0 %v683
    %v760 = vpop.f32.mrb[0].mxu0
    %v761 = vadd.f32 0.0, %v760
    %v762 = vpop.f32.mrb[0].mxu0
    %763 = vmatprep.mubr.f32.mxu0 0.0
    %764 = vmatmul.mubr.f32.gmra.mrb[0].mxu0 %v686
    %v765 = vpop.f32.mrb[0].mxu0
    %v766 = vadd.f32 0.0, %v765
    %v767 = vpop.f32.mrb[0].mxu0
    %768 = vmatprep.mubr.f32.mxu0 0.0
    %769 = vmatmul.mubr.f32.gmra.mrb[0].mxu0 %v689
    %v770 = vpop.f32.mrb[0].mxu0
    %v771 = vadd.f32 0.0, %v770
    %v772 = vpop.f32.mrb[0].mxu0
    %773 = vmatprep.mubr.f32.mxu0 0.0
    %774 = vmatmul.mubr.f32.gmra.mrb[0].mxu0 %v692
    %v775 = vpop.f32.mrb[0].mxu0
    %v776 = vadd.f32 0.0, %v775
    %v777 = vpop.f32.mrb[0].mxu0
    %778 = vdwg.mxu0
    %s779 = scalar_lea.vmem %s9, 32
    %v780 = vld [vmem:[%s779] sm:$0xff]
    %v781 = vld [vmem:[%s779 + $0x8] sm:$0xff]
    %v782 = vld [vmem:[%s779 + $0x10] sm:$0xff]
    %v783 = vld [vmem:[%s779 + $0x18] sm:$0xff]
    %s784 = scalar_lea.vmem %s10, 32
    %v785 = vld [vmem:[%s784] sm:$0xff]
    %v786 = vld [vmem:[%s784 + $0x8] sm:$0xff]
    %v787 = vld [vmem:[%s784 + $0x10] sm:$0xff]
    %v788 = vld [vmem:[%s784 + $0x18] sm:$0xff]
    %789 = vadd.xlane.f32.xlu0 %v761
    %v790 = vpop.xlane.xlu0 %789
    %791 = vadd.xlane.f32.xlu0 %v766
    %v792 = vpop.xlane.xlu0 %791
    %793 = vadd.xlane.f32.xlu0 %v771
    %v794 = vpop.xlane.xlu0 %793
    %795 = vadd.xlane.f32.xlu0 %v776
    %v796 = vpop.xlane.xlu0 %795
    %v797 = vmul.f32 %v790, 0.0078125
    %v798 = vmul.f32 %v792, 0.0078125
    %v799 = vmul.f32 %v794, 0.0078125
    %v800 = vmul.f32 %v796, 0.0078125
    %v801 = vmul.f32 %v761, %v761
    %v802 = vmul.f32 %v766, %v766
    %v803 = vmul.f32 %v771, %v771
    %v804 = vmul.f32 %v776, %v776
    %805 = vadd.xlane.f32.xlu0 %v801
    %v806 = vpop.xlane.xlu0 %805
    %807 = vadd.xlane.f32.xlu0 %v802
    %v808 = vpop.xlane.xlu0 %807
    %809 = vadd.xlane.f32.xlu0 %v803
    %v810 = vpop.xlane.xlu0 %809
    %811 = vadd.xlane.f32.xlu0 %v804
    %v812 = vpop.xlane.xlu0 %811
    %v813 = vmul.f32 %v806, 0.0078125
    %v814 = vmul.f32 %v808, 0.0078125
    %v815 = vmul.f32 %v810, 0.0078125
    %v816 = vmul.f32 %v812, 0.0078125
    %v817 = vmul.f32 %v797, %v797
    %v818 = vmul.f32 %v798, %v798
    %v819 = vmul.f32 %v799, %v799
    %v820 = vmul.f32 %v800, %v800
    %v821 = vsub.f32 %v813, %v817
    %v822 = vsub.f32 %v814, %v818
    %v823 = vsub.f32 %v815, %v819
    %v824 = vsub.f32 %v816, %v820
    %v825 = vmax.f32 %v821, 0.0
    %v826 = vmax.f32 %v822, 0.0
    %v827 = vmax.f32 %v823, 0.0
    %v828 = vmax.f32 %v824, 0.0
    %v829 = vadd.f32 %v825, 1e-05
    %v830 = vadd.f32 %v826, 1e-05
    %v831 = vadd.f32 %v827, 1e-05
    %v832 = vadd.f32 %v828, 1e-05
    %v833 = vrsqrt.pop %v829
    %v834 = vrsqrt.pop %v830
    %v835 = vrsqrt.pop %v831
    %v836 = vrsqrt.pop %v832
    %v837 = vmul.f32 %v780, %v833
    %v838 = vmul.f32 %v781, %v834
    %v839 = vmul.f32 %v782, %v835
    %v840 = vmul.f32 %v783, %v836
    %v841 = vmul.f32 %v797, %v837
    %v842 = vmul.f32 %v798, %v838
    %v843 = vmul.f32 %v799, %v839
    %v844 = vmul.f32 %v800, %v840
    %v845 = vsub.f32 %v785, %v841
    %v846 = vsub.f32 %v786, %v842
    %v847 = vsub.f32 %v787, %v843
    %v848 = vsub.f32 %v788, %v844
    %850 = vset.pattern.permute.xlu0 0
    %851 = vperm.xlu0 %850, %v837
    %v852 = vpop.permute.xlu0 %851
    %855 = vset.pattern.permute.xlu0 0
    %856 = vperm.xlu0 %855, %v838
    %v857 = vpop.permute.xlu0 %856
    %860 = vset.pattern.permute.xlu0 0
    %861 = vperm.xlu0 %860, %v839
    %v862 = vpop.permute.xlu0 %861
    %865 = vset.pattern.permute.xlu0 0
    %866 = vperm.xlu0 %865, %v840
    %v867 = vpop.permute.xlu0 %866
    %v869 = vmul.f32 %v761, %v852
    %v870 = vmul.f32 %v766, %v857
    %v871 = vmul.f32 %v771, %v862
    %v872 = vmul.f32 %v776, %v867
    %874 = vset.pattern.permute.xlu0 0
    %875 = vperm.xlu0 %874, %v845
    %v876 = vpop.permute.xlu0 %875
    %879 = vset.pattern.permute.xlu0 0
    %880 = vperm.xlu0 %879, %v846
    %v881 = vpop.permute.xlu0 %880
    %884 = vset.pattern.permute.xlu0 0
    %885 = vperm.xlu0 %884, %v847
    %v886 = vpop.permute.xlu0 %885
    %889 = vset.pattern.permute.xlu0 0
    %890 = vperm.xlu0 %889, %v848
    %v891 = vpop.permute.xlu0 %890
    %v893 = vadd.f32 %v869, %v876
    %v894 = vadd.f32 %v870, %v881
    %v895 = vadd.f32 %v871, %v886
    %v896 = vadd.f32 %v872, %v891
    %v897 = vmax.f32 %v893, 0.0
    %v898 = vmax.f32 %v894, 0.0
    %v899 = vmax.f32 %v895, 0.0
    %v900 = vmax.f32 %v896, 0.0
    %v901 = vld [vmem:[%s11] sm:$0x7]
    %v902 = vld [vmem:[%s12] sm:$0x7]
    %904 = vset.pattern.permute.xlu0 0
    %905 = vperm.xlu0 %904, %v902
    %v906 = vpop.permute.xlu0 %905
    %v909 = vsel %vm238, %v901, 0
    %911 = vmatprep.subr.mxu0 0.0
    %912 = vmatpush1.msra.mxu0 %v897
    %913 = vmatprep.subr.mxu0 0.0
    %914 = vmatpush1.msra.mxu0 %v898
    %915 = vmatprep.subr.mxu0 0.0
    %916 = vmatpush1.msra.mxu0 %v899
    %917 = vmatprep.subr.mxu0 0.0
    %918 = vmatpush1.msra.mxu0 %v900
    %919 = vmatprep.subr.mxu0 0.0
    %920 = vmatpush1.msra.mxu0 0.0
    %921 = vmatprep.subr.mxu0 0.0
    %922 = vmatpush1.msra.mxu0 0.0
    %923 = vmatprep.subr.mxu0 0.0
    %924 = vmatpush1.msra.mxu0 0.0
    %925 = vmatprep.subr.mxu0 0.0
    %926 = vmatpush1.msra.mxu0 0.0
    %927 = vmatprep.subr.mxu0 0.0
    %928 = vmatpush1.msra.mxu0 0.0
    %929 = vmatprep.subr.mxu0 0.0
    %930 = vmatpush1.msra.mxu0 0.0
    %931 = vmatprep.subr.mxu0 0.0
    %932 = vmatpush1.msra.mxu0 0.0
    %933 = vmatprep.subr.mxu0 0.0
    %934 = vmatpush1.msra.mxu0 0.0
    %935 = vmatprep.subr.mxu0 0.0
    %936 = vmatpush1.msra.mxu0 0.0
    %937 = vmatprep.subr.mxu0 0.0
    %938 = vmatpush1.msra.mxu0 0.0
    %939 = vmatprep.subr.mxu0 0.0
    %940 = vmatpush1.msra.mxu0 0.0
    %941 = vmatprep.subr.mxu0 0.0
    %942 = vmatpush1.msra.mxu0 0.0
    %943 = vmatprep.subr.mxu0 0.0
    %944 = vmatpush1.msra.mxu0 0.0
    %945 = vmatprep.subr.mxu0 0.0
    %946 = vmatpush1.msra.mxu0 0.0
    %947 = vmatprep.subr.mxu0 0.0
    %948 = vmatpush1.msra.mxu0 0.0
    %949 = vmatprep.subr.mxu0 0.0
    %950 = vmatpush1.msra.mxu0 0.0
    %951 = vmatprep.subr.mxu0 0.0
    %952 = vmatpush1.msra.mxu0 0.0
    %953 = vmatprep.subr.mxu0 0.0
    %954 = vmatpush1.msra.mxu0 0.0
    %955 = vmatprep.subr.mxu0 0.0
    %956 = vmatpush1.msra.mxu0 0.0
    %957 = vmatprep.subr.mxu0 0.0
    %958 = vmatpush1.msra.mxu0 0.0
    %959 = vmatprep.subr.mxu0 0.0
    %960 = vmatpush1.msra.mxu0 0.0
    %961 = vmatprep.subr.mxu0 0.0
    %962 = vmatpush1.msra.mxu0 0.0
    %963 = vmatprep.subr.mxu0 0.0
    %964 = vmatpush1.msra.mxu0 0.0
    %965 = vmatprep.subr.mxu0 0.0
    %966 = vmatpush1.msra.mxu0 0.0
    %967 = vmatprep.subr.mxu0 0.0
    %968 = vmatpush1.msra.mxu0 0.0
    %969 = vmatprep.subr.mxu0 0.0
    %970 = vmatpush1.msra.mxu0 0.0
    %971 = vmatprep.subr.mxu0 0.0
    %972 = vmatpush1.msra.mxu0 0.0
    %973 = vmatprep.subr.mxu0 0.0
    %974 = vmatpush1.msra.mxu0 0.0
    %975 = vmatprep.mubr.f32.mxu0 0.0
    %976 = vmatmul.mubr.f32.gmra.mrb[0].mxu0 %v909
    %v977 = vpop.f32.mrb[0].mxu0
    %v978 = vadd.f32 %v906, %v977
    %v979 = vpop.f32.mrb[0].mxu0
    %980 = vdwg.mxu0
    %v981 = vtanh.pop %v978
    %982 = vst [vmem:[#allocation2] sm:$0x7] %v981
    // Predicated region
    $region54: #{tpu_custom_call.1} parent=1 // pred_check
      _
    $region55: #{tpu_custom_call.1} parent=1 // pred_check_branch
      %984 = sbr.rel (0) target = $region57
    $region56: #{tpu_custom_call.1} parent=1 // pred_region
      %s986 = ssub.s32 64, 64
      %987 = vsyncadd [#allocation3], %s986
      %s989 = sshll.u32 [#allocation2], 4
      %s990 = int_to_ptr.vmem [resolvable:$true] %s989
      %992 = dma.vmem_to_hbm [thread:$0]  %s990, 64, %s13, [#allocation3]
    $region57: #{tpu_custom_call.1} parent=1 // pred_fallthru
      _
    // Predicated region
    $region58: #{tpu_custom_call.1} parent=1 // pred_check
      _
    $region59: #{tpu_custom_call.1} parent=1 // pred_check_branch
      %994 = sbr.rel (0) target = $region61
    $region60: #{tpu_custom_call.1} parent=1 // pred_region
      %995 = dma.done [#allocation3], 64
    $region61: #{tpu_custom_call.1} parent=1 // pred_fallthru
      _
    %996 = vsyncpa [#allocation3], 1

</llo_original>
